<compile_context>
chip_gen: v7x
topology: tpu7x:2x2x1
jax: 0.10.0
libtpu: 0.0.40
codegen_flags: <defaults>
</compile_context>

<pallas_src>
import functools

import jax
import jax.numpy as jnp
from jax.experimental import pallas as pl
from jax.experimental.pallas import tpu as pltpu


def _psi_kernel(x_ref, s_ref, o_ref, perm_ref, *, block_size, channel_tile,
                height, width):
    # x_ref   : (Ct*H, W)   flattened channel-tile slab (row r = c*H + h)
    # s_ref   : (W, W)      one-hot lane permutation, output cols grouped [wb][j]
    # o_ref   : (bs, bs, Ct, Ho, Wo)
    # perm_ref: (Ct*H, W)   f32 VMEM scratch holding the lane-permuted slab
    bs = block_size
    Ct = channel_tile
    H, W = height, width
    Ho, Wo = H // bs, W // bs

    # (1) Lane (column) gather: a single wide MXU matmul per grid step.
    #     perm[r, wb*Wo + j] = x[r, j*bs + wb]
    perm_ref[...] = jnp.dot(
        x_ref[...], s_ref[...],
        preferred_element_type=jnp.float32,
        precision=jax.lax.Precision.HIGHEST,
    )

    # (2) Row (sublane) gather with native strided sublane loads, then
    #     contiguous (Ho, Wo) stores per (hb, wb, c).  Ct is VMEM-bounded,
    #     so the unrolled loop stays small.
    for c in range(Ct):
        base = c * H
        for hb in range(bs):
            rows = perm_ref[pl.ds(base + hb, Ho, stride=bs), :]     # (Ho, W)
            for wb in range(bs):
                o_ref[hb, wb, c] = rows[:, wb * Wo:(wb + 1) * Wo].astype(
                    o_ref.dtype)


def _pick_channel_tile(C, H, W, itemsize,
                       budget_bytes=16 << 20, slab_bytes=4 << 20):
    """Largest Ct | C keeping (Ct*H) 8-aligned and VMEM usage within budget."""
    itemsize = max(int(itemsize), 1)
    # Per-channel VMEM: 2x input + 2x output (double-buffered) + 1x f32 scratch.
    per_ct = H * W * (4 * itemsize + 4)
    max_ct = max(1, min(budget_bytes // per_ct,
                        slab_bytes // (H * W * itemsize)))
    for ct in range(int(min(C, max_ct)), 0, -1):
        if C % ct == 0 and ((ct * H) % 8 == 0 or ct == C):
            return ct
    # Fall back to the full channel dim (exempt from the 8-alignment rule).
    return C


def psi_forward(x, block_size, *, channel_tile=None):
    """x: (B, C, H, W) NCHW.  Returns (B, C*bs*bs, H/bs, W/bs)."""
    B, C, H, W = x.shape
    bs = int(block_size)
    assert H % bs == 0 and W % bs == 0, "spatial dims must divide block_size"
    Ho, Wo = H // bs, W // bs
    itemsize = jnp.dtype(x.dtype).itemsize

    Ct = (_pick_channel_tile(C, H, W, itemsize)
          if channel_tile is None else int(channel_tile))
    assert C % Ct == 0, "channel tile must divide C"
    assert (Ct * H) % 8 == 0 or Ct == C, "channel tile breaks sublane alignment"

    # One-hot lane permutation: S[w, wb*Wo + j] = 1 iff w == j*bs + wb.
    p = jnp.arange(W)
    src = (p % Wo) * bs + (p // Wo)
    S = (jnp.arange(W)[:, None] == src[None, :]).astype(x.dtype)      # (W, W)

    x2 = x.reshape(B, C * H, W)            # adjacent-dim merge: free

    blk_bytes = Ct * H * W * itemsize
    scratch_bytes = Ct * H * W * 4
    s_bytes = W * W * itemsize
    vmem_need = 4 * blk_bytes + scratch_bytes + 2 * s_bytes
    vmem_limit = int(min(max(2 * vmem_need, 16 << 20), 64 << 20))

    kernel = functools.partial(_psi_kernel, block_size=bs, channel_tile=Ct,
                               height=H, width=W)

    out6 = pl.pallas_call(
        kernel,
        out_shape=jax.ShapeDtypeStruct((B, bs, bs, C, Ho, Wo), x.dtype),
        grid_spec=pltpu.PrefetchScalarGridSpec(
            num_scalar_prefetch=0,
            grid=(B, C // Ct),
            in_specs=[
                pl.BlockSpec((None, Ct * H, W), lambda b, ct: (b, ct, 0)),
                pl.BlockSpec((W, W), lambda b, ct: (0, 0)),
            ],
            out_specs=pl.BlockSpec((None, bs, bs, Ct, Ho, Wo),
                                   lambda b, ct: (b, 0, 0, ct, 0, 0)),
            scratch_shapes=[pltpu.VMEM((Ct * H, W), jnp.float32)],
        ),
        compiler_params=pltpu.CompilerParams(
            dimension_semantics=("parallel", "parallel"),
            vmem_limit_bytes=vmem_limit,
        ),
        cost_estimate=pl.CostEstimate(
            flops=2 * B * C * H * W * W,
            transcendentals=0,
            bytes_accessed=2 * B * C * H * W * itemsize + W * W * itemsize,
        ),
    )(x2, S)

    # (hb, wb, c) are adjacent row-major -> the merge is a free reshape.
    return out6.reshape(B, bs * bs * C, Ho, Wo)


def psi_reference(x, bs):
    """Pure-JAX reference matching torch `psi.forward` semantics exactly."""
    B, C, H, W = x.shape
    y = x.transpose(0, 2, 3, 1)                       # (B, H, W, C)
    y = y.reshape(B, H // bs, bs, W // bs, bs, C)
    y = y.transpose(0, 1, 3, 2, 4, 5)                 # (B, Ho, Wo, hb, wb, C)
    y = y.reshape(B, H // bs, W // bs, bs * bs * C)
    return y.transpose(0, 3, 1, 2)                    # (B, C*bs*bs, Ho, Wo)


if __name__ == "__main__":
    key = jax.random.PRNGKey(0)
    B, C, H, W, bs = 2, 4, 16, 16, 2
    x = jax.random.normal(key, (B, C, H, W), dtype=jnp.float32)

    ref = psi_reference(x, bs)

    fwd = jax.jit(lambda v: psi_forward(v, bs))
    out = jax.block_until_ready(fwd(x))
    assert out.shape == (B, C * bs * bs, H // bs, W // bs), out.shape
    assert bool(jnp.allclose(out, ref, rtol=1e-6, atol=1e-6)), "psi mismatch"

    # Exercise the channel-tiled path (grid over C) explicitly.
    fwd_t = jax.jit(lambda v: psi_forward(v, bs, channel_tile=2))
    out_t = jax.block_until_ready(fwd_t(x))
    assert bool(jnp.allclose(out_t, ref, rtol=1e-6, atol=1e-6)), "tiled mismatch"

    # TODO(synk): `psi.inverse` (depth-to-space) not implemented; only forward requested.
    print("KERNEL_OK")
</pallas_src>

<mosaic_0001>
module attributes {stable_mosaic.version = 11 : i64} {
  func.func @_psi_kernel(%arg0: i32, %arg1: i32, %arg2: memref<1x64x16xf32, #tpu.memory_space<vmem>>, %arg3: memref<16x16xf32, #tpu.memory_space<vmem>>, %arg4: memref<1x2x2x4x8x8xf32, #tpu.memory_space<vmem>>, %arg5: memref<64x16xf32, #tpu.memory_space<vmem>>) attributes {dimension_semantics = [#tpu.dimension_semantics<parallel>, #tpu.dimension_semantics<parallel>], iteration_bounds = array<i64: 2, 1>, scalar_prefetch = 0 : i64, scratch_operands = 1 : i64, tpu.core_type = #tpu.core_type<tc>, window_params = [{transform_indices = @transform_0, window_bounds = array<i64: 1, 64, 16>}, {pipeline_mode = #tpu.pipeline_mode<synchronous>, transform_indices = @transform_1, window_bounds = array<i64: 16, 16>}, {transform_indices = @transform_2, window_bounds = array<i64: 1, 2, 2, 4, 8, 8>}]} {
    %c0 = arith.constant 0 : index
    %c0_0 = arith.constant 0 : index
    %c0_1 = arith.constant 0 : index
    %0 = vector.load %arg2[%c0, %c0_0, %c0_1] : memref<1x64x16xf32, #tpu.memory_space<vmem>>, vector<1x64x16xf32>
    %1 = vector.shape_cast %0 : vector<1x64x16xf32> to vector<64x16xf32>
    %c0_2 = arith.constant 0 : index
    %c0_3 = arith.constant 0 : index
    %2 = vector.load %arg3[%c0_2, %c0_3] : memref<16x16xf32, #tpu.memory_space<vmem>>, vector<16x16xf32>
    %cst = arith.constant dense<0.000000e+00> : vector<64x16xf32>
    %3 = tpu.matmul %1, %2, %cst {dimension_numbers = #tpu.dot_dimension_numbers<[1], [0], [0], [1], [0, 0, 1, 1], [], []>, precision = #tpu.contract_precision<fp32>} : vector<64x16xf32>, vector<16x16xf32>, vector<64x16xf32> -> vector<64x16xf32>
    %c0_4 = arith.constant 0 : index
    %c0_5 = arith.constant 0 : index
    %4 = vector.load %arg5[%c0_4, %c0_5] : memref<64x16xf32, #tpu.memory_space<vmem>>, vector<64x16xf32>
    tpu.vector_store %arg5[%c0_4, %c0_5], %3 {strides = array<i32>} : memref<64x16xf32, #tpu.memory_space<vmem>>, vector<64x16xf32>,
    %c0_6 = arith.constant 0 : index
    %c0_7 = arith.constant 0 : index
    %5 = tpu.strided_load %arg5[%c0_6, %c0_7] {strides = array<i32: 2, 1>} : memref<64x16xf32, #tpu.memory_space<vmem>>, vector<8x16xf32>
    %6 = vector.extract_strided_slice %5 {offsets = [0, 0], sizes = [8, 8], strides = [1, 1]} : vector<8x16xf32> to vector<8x8xf32>
    %c0_8 = arith.constant 0 : index
    %c0_9 = arith.constant 0 : index
    %c0_10 = arith.constant 0 : index
    %c0_11 = arith.constant 0 : index
    %c0_12 = arith.constant 0 : index
    %c0_13 = arith.constant 0 : index
    %7 = vector.load %arg4[%c0_8, %c0_9, %c0_10, %c0_11, %c0_12, %c0_13] : memref<1x2x2x4x8x8xf32, #tpu.memory_space<vmem>>, vector<1x1x1x1x8x8xf32>
    %8 = vector.shape_cast %7 : vector<1x1x1x1x8x8xf32> to vector<8x8xf32>
    %9 = vector.shape_cast %6 : vector<8x8xf32> to vector<1x1x1x1x8x8xf32>
    tpu.vector_store %arg4[%c0_8, %c0_9, %c0_10, %c0_11, %c0_12, %c0_13], %9 {strides = array<i32>} : memref<1x2x2x4x8x8xf32, #tpu.memory_space<vmem>>, vector<1x1x1x1x8x8xf32>,
    %10 = vector.extract_strided_slice %5 {offsets = [0, 8], sizes = [8, 8], strides = [1, 1]} : vector<8x16xf32> to vector<8x8xf32>
    %c0_14 = arith.constant 0 : index
    %c0_15 = arith.constant 0 : index
    %c1 = arith.constant 1 : index
    %c0_16 = arith.constant 0 : index
    %c0_17 = arith.constant 0 : index
    %c0_18 = arith.constant 0 : index
    %11 = vector.load %arg4[%c0_14, %c0_15, %c1, %c0_16, %c0_17, %c0_18] : memref<1x2x2x4x8x8xf32, #tpu.memory_space<vmem>>, vector<1x1x1x1x8x8xf32>
    %12 = vector.shape_cast %11 : vector<1x1x1x1x8x8xf32> to vector<8x8xf32>
    %13 = vector.shape_cast %10 : vector<8x8xf32> to vector<1x1x1x1x8x8xf32>
    tpu.vector_store %arg4[%c0_14, %c0_15, %c1, %c0_16, %c0_17, %c0_18], %13 {strides = array<i32>} : memref<1x2x2x4x8x8xf32, #tpu.memory_space<vmem>>, vector<1x1x1x1x8x8xf32>,
    %c1_19 = arith.constant 1 : index
    %c0_20 = arith.constant 0 : index
    %14 = tpu.strided_load %arg5[%c1_19, %c0_20] {strides = array<i32: 2, 1>} : memref<64x16xf32, #tpu.memory_space<vmem>>, vector<8x16xf32>
    %15 = vector.extract_strided_slice %14 {offsets = [0, 0], sizes = [8, 8], strides = [1, 1]} : vector<8x16xf32> to vector<8x8xf32>
    %c0_21 = arith.constant 0 : index
    %c1_22 = arith.constant 1 : index
    %c0_23 = arith.constant 0 : index
    %c0_24 = arith.constant 0 : index
    %c0_25 = arith.constant 0 : index
    %c0_26 = arith.constant 0 : index
    %16 = vector.load %arg4[%c0_21, %c1_22, %c0_23, %c0_24, %c0_25, %c0_26] : memref<1x2x2x4x8x8xf32, #tpu.memory_space<vmem>>, vector<1x1x1x1x8x8xf32>
    %17 = vector.shape_cast %16 : vector<1x1x1x1x8x8xf32> to vector<8x8xf32>
    %18 = vector.shape_cast %15 : vector<8x8xf32> to vector<1x1x1x1x8x8xf32>
    tpu.vector_store %arg4[%c0_21, %c1_22, %c0_23, %c0_24, %c0_25, %c0_26], %18 {strides = array<i32>} : memref<1x2x2x4x8x8xf32, #tpu.memory_space<vmem>>, vector<1x1x1x1x8x8xf32>,
    %19 = vector.extract_strided_slice %14 {offsets = [0, 8], sizes = [8, 8], strides = [1, 1]} : vector<8x16xf32> to vector<8x8xf32>
    %c0_27 = arith.constant 0 : index
    %c1_28 = arith.constant 1 : index
    %c1_29 = arith.constant 1 : index
    %c0_30 = arith.constant 0 : index
    %c0_31 = arith.constant 0 : index
    %c0_32 = arith.constant 0 : index
    %20 = vector.load %arg4[%c0_27, %c1_28, %c1_29, %c0_30, %c0_31, %c0_32] : memref<1x2x2x4x8x8xf32, #tpu.memory_space<vmem>>, vector<1x1x1x1x8x8xf32>
    %21 = vector.shape_cast %20 : vector<1x1x1x1x8x8xf32> to vector<8x8xf32>
    %22 = vector.shape_cast %19 : vector<8x8xf32> to vector<1x1x1x1x8x8xf32>
    tpu.vector_store %arg4[%c0_27, %c1_28, %c1_29, %c0_30, %c0_31, %c0_32], %22 {strides = array<i32>} : memref<1x2x2x4x8x8xf32, #tpu.memory_space<vmem>>, vector<1x1x1x1x8x8xf32>,
    %c16 = arith.constant 16 : index
    %c0_33 = arith.constant 0 : index
    %23 = tpu.strided_load %arg5[%c16, %c0_33] {strides = array<i32: 2, 1>} : memref<64x16xf32, #tpu.memory_space<vmem>>, vector<8x16xf32>
    %24 = vector.extract_strided_slice %23 {offsets = [0, 0], sizes = [8, 8], strides = [1, 1]} : vector<8x16xf32> to vector<8x8xf32>
    %c0_34 = arith.constant 0 : index
    %c0_35 = arith.constant 0 : index
    %c0_36 = arith.constant 0 : index
    %c1_37 = arith.constant 1 : index
    %c0_38 = arith.constant 0 : index
    %c0_39 = arith.constant 0 : index
    %25 = vector.load %arg4[%c0_34, %c0_35, %c0_36, %c1_37, %c0_38, %c0_39] : memref<1x2x2x4x8x8xf32, #tpu.memory_space<vmem>>, vector<1x1x1x1x8x8xf32>
    %26 = vector.shape_cast %25 : vector<1x1x1x1x8x8xf32> to vector<8x8xf32>
    %27 = vector.shape_cast %24 : vector<8x8xf32> to vector<1x1x1x1x8x8xf32>
    tpu.vector_store %arg4[%c0_34, %c0_35, %c0_36, %c1_37, %c0_38, %c0_39], %27 {strides = array<i32>} : memref<1x2x2x4x8x8xf32, #tpu.memory_space<vmem>>, vector<1x1x1x1x8x8xf32>,
    %28 = vector.extract_strided_slice %23 {offsets = [0, 8], sizes = [8, 8], strides = [1, 1]} : vector<8x16xf32> to vector<8x8xf32>
    %c0_40 = arith.constant 0 : index
    %c0_41 = arith.constant 0 : index
    %c1_42 = arith.constant 1 : index
    %c1_43 = arith.constant 1 : index
    %c0_44 = arith.constant 0 : index
    %c0_45 = arith.constant 0 : index
    %29 = vector.load %arg4[%c0_40, %c0_41, %c1_42, %c1_43, %c0_44, %c0_45] : memref<1x2x2x4x8x8xf32, #tpu.memory_space<vmem>>, vector<1x1x1x1x8x8xf32>
    %30 = vector.shape_cast %29 : vector<1x1x1x1x8x8xf32> to vector<8x8xf32>
    %31 = vector.shape_cast %28 : vector<8x8xf32> to vector<1x1x1x1x8x8xf32>
    tpu.vector_store %arg4[%c0_40, %c0_41, %c1_42, %c1_43, %c0_44, %c0_45], %31 {strides = array<i32>} : memref<1x2x2x4x8x8xf32, #tpu.memory_space<vmem>>, vector<1x1x1x1x8x8xf32>,
    %c17 = arith.constant 17 : index
    %c0_46 = arith.constant 0 : index
    %32 = tpu.strided_load %arg5[%c17, %c0_46] {strides = array<i32: 2, 1>} : memref<64x16xf32, #tpu.memory_space<vmem>>, vector<8x16xf32>
    %33 = vector.extract_strided_slice %32 {offsets = [0, 0], sizes = [8, 8], strides = [1, 1]} : vector<8x16xf32> to vector<8x8xf32>
    %c0_47 = arith.constant 0 : index
    %c1_48 = arith.constant 1 : index
    %c0_49 = arith.constant 0 : index
    %c1_50 = arith.constant 1 : index
    %c0_51 = arith.constant 0 : index
    %c0_52 = arith.constant 0 : index
    %34 = vector.load %arg4[%c0_47, %c1_48, %c0_49, %c1_50, %c0_51, %c0_52] : memref<1x2x2x4x8x8xf32, #tpu.memory_space<vmem>>, vector<1x1x1x1x8x8xf32>
    %35 = vector.shape_cast %34 : vector<1x1x1x1x8x8xf32> to vector<8x8xf32>
    %36 = vector.shape_cast %33 : vector<8x8xf32> to vector<1x1x1x1x8x8xf32>
    tpu.vector_store %arg4[%c0_47, %c1_48, %c0_49, %c1_50, %c0_51, %c0_52], %36 {strides = array<i32>} : memref<1x2x2x4x8x8xf32, #tpu.memory_space<vmem>>, vector<1x1x1x1x8x8xf32>,
    %37 = vector.extract_strided_slice %32 {offsets = [0, 8], sizes = [8, 8], strides = [1, 1]} : vector<8x16xf32> to vector<8x8xf32>
    %c0_53 = arith.constant 0 : index
    %c1_54 = arith.constant 1 : index
    %c1_55 = arith.constant 1 : index
    %c1_56 = arith.constant 1 : index
    %c0_57 = arith.constant 0 : index
    %c0_58 = arith.constant 0 : index
    %38 = vector.load %arg4[%c0_53, %c1_54, %c1_55, %c1_56, %c0_57, %c0_58] : memref<1x2x2x4x8x8xf32, #tpu.memory_space<vmem>>, vector<1x1x1x1x8x8xf32>
    %39 = vector.shape_cast %38 : vector<1x1x1x1x8x8xf32> to vector<8x8xf32>
    %40 = vector.shape_cast %37 : vector<8x8xf32> to vector<1x1x1x1x8x8xf32>
    tpu.vector_store %arg4[%c0_53, %c1_54, %c1_55, %c1_56, %c0_57, %c0_58], %40 {strides = array<i32>} : memref<1x2x2x4x8x8xf32, #tpu.memory_space<vmem>>, vector<1x1x1x1x8x8xf32>,
    %c32 = arith.constant 32 : index
    %c0_59 = arith.constant 0 : index
    %41 = tpu.strided_load %arg5[%c32, %c0_59] {strides = array<i32: 2, 1>} : memref<64x16xf32, #tpu.memory_space<vmem>>, vector<8x16xf32>
    %42 = vector.extract_strided_slice %41 {offsets = [0, 0], sizes = [8, 8], strides = [1, 1]} : vector<8x16xf32> to vector<8x8xf32>
    %c0_60 = arith.constant 0 : index
    %c0_61 = arith.constant 0 : index
    %c0_62 = arith.constant 0 : index
    %c2 = arith.constant 2 : index
    %c0_63 = arith.constant 0 : index
    %c0_64 = arith.constant 0 : index
    %43 = vector.load %arg4[%c0_60, %c0_61, %c0_62, %c2, %c0_63, %c0_64] : memref<1x2x2x4x8x8xf32, #tpu.memory_space<vmem>>, vector<1x1x1x1x8x8xf32>
    %44 = vector.shape_cast %43 : vector<1x1x1x1x8x8xf32> to vector<8x8xf32>
    %45 = vector.shape_cast %42 : vector<8x8xf32> to vector<1x1x1x1x8x8xf32>
    tpu.vector_store %arg4[%c0_60, %c0_61, %c0_62, %c2, %c0_63, %c0_64], %45 {strides = array<i32>} : memref<1x2x2x4x8x8xf32, #tpu.memory_space<vmem>>, vector<1x1x1x1x8x8xf32>,
    %46 = vector.extract_strided_slice %41 {offsets = [0, 8], sizes = [8, 8], strides = [1, 1]} : vector<8x16xf32> to vector<8x8xf32>
    %c0_65 = arith.constant 0 : index
    %c0_66 = arith.constant 0 : index
    %c1_67 = arith.constant 1 : index
    %c2_68 = arith.constant 2 : index
    %c0_69 = arith.constant 0 : index
    %c0_70 = arith.constant 0 : index
    %47 = vector.load %arg4[%c0_65, %c0_66, %c1_67, %c2_68, %c0_69, %c0_70] : memref<1x2x2x4x8x8xf32, #tpu.memory_space<vmem>>, vector<1x1x1x1x8x8xf32>
    %48 = vector.shape_cast %47 : vector<1x1x1x1x8x8xf32> to vector<8x8xf32>
    %49 = vector.shape_cast %46 : vector<8x8xf32> to vector<1x1x1x1x8x8xf32>
    tpu.vector_store %arg4[%c0_65, %c0_66, %c1_67, %c2_68, %c0_69, %c0_70], %49 {strides = array<i32>} : memref<1x2x2x4x8x8xf32, #tpu.memory_space<vmem>>, vector<1x1x1x1x8x8xf32>,
    %c33 = arith.constant 33 : index
    %c0_71 = arith.constant 0 : index
    %50 = tpu.strided_load %arg5[%c33, %c0_71] {strides = array<i32: 2, 1>} : memref<64x16xf32, #tpu.memory_space<vmem>>, vector<8x16xf32>
    %51 = vector.extract_strided_slice %50 {offsets = [0, 0], sizes = [8, 8], strides = [1, 1]} : vector<8x16xf32> to vector<8x8xf32>
    %c0_72 = arith.constant 0 : index
    %c1_73 = arith.constant 1 : index
    %c0_74 = arith.constant 0 : index
    %c2_75 = arith.constant 2 : index
    %c0_76 = arith.constant 0 : index
    %c0_77 = arith.constant 0 : index
    %52 = vector.load %arg4[%c0_72, %c1_73, %c0_74, %c2_75, %c0_76, %c0_77] : memref<1x2x2x4x8x8xf32, #tpu.memory_space<vmem>>, vector<1x1x1x1x8x8xf32>
    %53 = vector.shape_cast %52 : vector<1x1x1x1x8x8xf32> to vector<8x8xf32>
    %54 = vector.shape_cast %51 : vector<8x8xf32> to vector<1x1x1x1x8x8xf32>
    tpu.vector_store %arg4[%c0_72, %c1_73, %c0_74, %c2_75, %c0_76, %c0_77], %54 {strides = array<i32>} : memref<1x2x2x4x8x8xf32, #tpu.memory_space<vmem>>, vector<1x1x1x1x8x8xf32>,
    %55 = vector.extract_strided_slice %50 {offsets = [0, 8], sizes = [8, 8], strides = [1, 1]} : vector<8x16xf32> to vector<8x8xf32>
    %c0_78 = arith.constant 0 : index
    %c1_79 = arith.constant 1 : index
    %c1_80 = arith.constant 1 : index
    %c2_81 = arith.constant 2 : index
    %c0_82 = arith.constant 0 : index
    %c0_83 = arith.constant 0 : index
    %56 = vector.load %arg4[%c0_78, %c1_79, %c1_80, %c2_81, %c0_82, %c0_83] : memref<1x2x2x4x8x8xf32, #tpu.memory_space<vmem>>, vector<1x1x1x1x8x8xf32>
    %57 = vector.shape_cast %56 : vector<1x1x1x1x8x8xf32> to vector<8x8xf32>
    %58 = vector.shape_cast %55 : vector<8x8xf32> to vector<1x1x1x1x8x8xf32>
    tpu.vector_store %arg4[%c0_78, %c1_79, %c1_80, %c2_81, %c0_82, %c0_83], %58 {strides = array<i32>} : memref<1x2x2x4x8x8xf32, #tpu.memory_space<vmem>>, vector<1x1x1x1x8x8xf32>,
    %c48 = arith.constant 48 : index
    %c0_84 = arith.constant 0 : index
    %59 = tpu.strided_load %arg5[%c48, %c0_84] {strides = array<i32: 2, 1>} : memref<64x16xf32, #tpu.memory_space<vmem>>, vector<8x16xf32>
    %60 = vector.extract_strided_slice %59 {offsets = [0, 0], sizes = [8, 8], strides = [1, 1]} : vector<8x16xf32> to vector<8x8xf32>
    %c0_85 = arith.constant 0 : index
    %c0_86 = arith.constant 0 : index
    %c0_87 = arith.constant 0 : index
    %c3 = arith.constant 3 : index
    %c0_88 = arith.constant 0 : index
    %c0_89 = arith.constant 0 : index
    %61 = vector.load %arg4[%c0_85, %c0_86, %c0_87, %c3, %c0_88, %c0_89] : memref<1x2x2x4x8x8xf32, #tpu.memory_space<vmem>>, vector<1x1x1x1x8x8xf32>
    %62 = vector.shape_cast %61 : vector<1x1x1x1x8x8xf32> to vector<8x8xf32>
    %63 = vector.shape_cast %60 : vector<8x8xf32> to vector<1x1x1x1x8x8xf32>
    tpu.vector_store %arg4[%c0_85, %c0_86, %c0_87, %c3, %c0_88, %c0_89], %63 {strides = array<i32>} : memref<1x2x2x4x8x8xf32, #tpu.memory_space<vmem>>, vector<1x1x1x1x8x8xf32>,
    %64 = vector.extract_strided_slice %59 {offsets = [0, 8], sizes = [8, 8], strides = [1, 1]} : vector<8x16xf32> to vector<8x8xf32>
    %c0_90 = arith.constant 0 : index
    %c0_91 = arith.constant 0 : index
    %c1_92 = arith.constant 1 : index
    %c3_93 = arith.constant 3 : index
    %c0_94 = arith.constant 0 : index
    %c0_95 = arith.constant 0 : index
    %65 = vector.load %arg4[%c0_90, %c0_91, %c1_92, %c3_93, %c0_94, %c0_95] : memref<1x2x2x4x8x8xf32, #tpu.memory_space<vmem>>, vector<1x1x1x1x8x8xf32>
    %66 = vector.shape_cast %65 : vector<1x1x1x1x8x8xf32> to vector<8x8xf32>
    %67 = vector.shape_cast %64 : vector<8x8xf32> to vector<1x1x1x1x8x8xf32>
    tpu.vector_store %arg4[%c0_90, %c0_91, %c1_92, %c3_93, %c0_94, %c0_95], %67 {strides = array<i32>} : memref<1x2x2x4x8x8xf32, #tpu.memory_space<vmem>>, vector<1x1x1x1x8x8xf32>,
    %c49 = arith.constant 49 : index
    %c0_96 = arith.constant 0 : index
    %68 = tpu.strided_load %arg5[%c49, %c0_96] {strides = array<i32: 2, 1>} : memref<64x16xf32, #tpu.memory_space<vmem>>, vector<8x16xf32>
    %69 = vector.extract_strided_slice %68 {offsets = [0, 0], sizes = [8, 8], strides = [1, 1]} : vector<8x16xf32> to vector<8x8xf32>
    %c0_97 = arith.constant 0 : index
    %c1_98 = arith.constant 1 : index
    %c0_99 = arith.constant 0 : index
    %c3_100 = arith.constant 3 : index
    %c0_101 = arith.constant 0 : index
    %c0_102 = arith.constant 0 : index
    %70 = vector.load %arg4[%c0_97, %c1_98, %c0_99, %c3_100, %c0_101, %c0_102] : memref<1x2x2x4x8x8xf32, #tpu.memory_space<vmem>>, vector<1x1x1x1x8x8xf32>
    %71 = vector.shape_cast %70 : vector<1x1x1x1x8x8xf32> to vector<8x8xf32>
    %72 = vector.shape_cast %69 : vector<8x8xf32> to vector<1x1x1x1x8x8xf32>
    tpu.vector_store %arg4[%c0_97, %c1_98, %c0_99, %c3_100, %c0_101, %c0_102], %72 {strides = array<i32>} : memref<1x2x2x4x8x8xf32, #tpu.memory_space<vmem>>, vector<1x1x1x1x8x8xf32>,
    %73 = vector.extract_strided_slice %68 {offsets = [0, 8], sizes = [8, 8], strides = [1, 1]} : vector<8x16xf32> to vector<8x8xf32>
    %c0_103 = arith.constant 0 : index
    %c1_104 = arith.constant 1 : index
    %c1_105 = arith.constant 1 : index
    %c3_106 = arith.constant 3 : index
    %c0_107 = arith.constant 0 : index
    %c0_108 = arith.constant 0 : index
    %74 = vector.load %arg4[%c0_103, %c1_104, %c1_105, %c3_106, %c0_107, %c0_108] : memref<1x2x2x4x8x8xf32, #tpu.memory_space<vmem>>, vector<1x1x1x1x8x8xf32>
    %75 = vector.shape_cast %74 : vector<1x1x1x1x8x8xf32> to vector<8x8xf32>
    %76 = vector.shape_cast %73 : vector<8x8xf32> to vector<1x1x1x1x8x8xf32>
    tpu.vector_store %arg4[%c0_103, %c1_104, %c1_105, %c3_106, %c0_107, %c0_108], %76 {strides = array<i32>} : memref<1x2x2x4x8x8xf32, #tpu.memory_space<vmem>>, vector<1x1x1x1x8x8xf32>,
    return
  }
  func.func @transform_0(%arg0: i32, %arg1: i32) -> (i32, i32, i32) {
    %c0_i32 = arith.constant 0 : i32
    %c0_i32_0 = arith.constant 0 : i32
    return %arg0, %arg1, %c0_i32 : i32, i32, i32
  }
  func.func @transform_1(%arg0: i32, %arg1: i32) -> (i32, i32) {
    %c0_i32 = arith.constant 0 : i32
    %c0_i32_0 = arith.constant 0 : i32
    %c0_i32_1 = arith.constant 0 : i32
    return %c0_i32, %c0_i32_0 : i32, i32
  }
  func.func @transform_2(%arg0: i32, %arg1: i32) -> (i32, i32, i32, i32, i32, i32) {
    %c0_i32 = arith.constant 0 : i32
    %c0_i32_0 = arith.constant 0 : i32
    %c0_i32_1 = arith.constant 0 : i32
    %c0_i32_2 = arith.constant 0 : i32
    %c0_i32_3 = arith.constant 0 : i32
    return %arg0, %c0_i32, %c0_i32_0, %arg1, %c0_i32_1, %c0_i32_2 : i32, i32, i32, i32, i32, i32
  }
}

</mosaic_0001>

<llo_original>
// kernel: _lambda_.1
$region0: #{_lambda_.1}
  #allocation0 [shape = 'u32[]', space=smem, size = 0x4, offset = 0x4, fixed_abs, tag = 'smem constant byte address 0x4 - core index']
  #allocation1 [shape = 'u32[144,128]{1,0:T(1,128)}', space=vmem, size = 0x12000, scoped, tag = 'internal scratch']
  #allocation2 [shape = 'f32[64,16]{1,0:T(8,128)}', space=vmem, size = 0x8000, scoped, tag = 'scratch operand']
  %s0 = inlined_call_operand.hbm [shape: f32[2,64,16], index: 0, kind: input, shape index: {}]
  %s1 = inlined_call_operand.vmem [shape: f32[16,16], index: 1, kind: input, shape index: {}]
  %s2 = inlined_call_operand.vmem [shape: f32[2,2,2,4,8,8], index: 2, kind: output, shape index: {}]
  %s3 = sld [smem:[#allocation0]]
  $region45: #{_lambda_.1} parent=0
    _
  %s5 = ssub.s32 1, %s3
  %s6 = scalar_select 0, %s5, %s3
  $region1: #{_lambda_.1} parent=0
    #allocation3 [shape = 'u8[65536]{0}', space=vmem, size = 0x10000, scoped, tag = 'input window, operand 0']
    #allocation4 [shape = 's32[2]{0}', space=sflag, size = 0x8, scoped, tag = 'scoped memory for _lambda_.1']
    %7 = vsyncpa [#allocation4], 0
    %s8 = scalar_lea.sflag [#allocation4], 1
    %9 = vsyncpa %s8, 0
    loop: start=0, step=1, limit=4
    $region2: #{_lambda_.1} parent=1 // loop_pre_header
      _
    $region3: #{_lambda_.1} parent=1 // loop_header
      %s11 = sphi 0, %s15
      %p12 = scmp.ge.s32.totalorder %s11, 4
      %s18 = sphi 0, %s30
      %s19 = sphi 0, %s26
      %s20 = sphi 0, %s18
      %s21 = sphi 0, %s19
      %s22 = sphi 0, %s20
      %s23 = sphi 0, %s21
      %s35 = sphi 0, %s37
      %s38 = sphi 0, %s35
      %s39 = sphi 0, %s38
      %s55 = sphi 0, %s39
      %s59 = sphi 0, %s59
      %s61 = sphi 0, %s59
      %s62 = sphi 0, %s61
      %s76 = sphi 0, %s62
      %s84 = sphi 0, %s86
      %s87 = sphi 0, %s84
      %s88 = sphi 0, %s87
      %s104 = sphi 0, %s88
    $region4: #{_lambda_.1} parent=1 // loop_header_branch
      %14 = sbr.rel (%p12) target = $region8
    $region5: #{_lambda_.1} parent=1 // loop_body
      %s16 = ssub.s32 %s11, 1
      %s17 = ssub.s32 %s11, 2
      %s24 = sadd.s32 1, %s19
      %p25 = scmp.ge.s32.totalorder %s24, 1
      %s26 = scalar_select %p25, 0, %s24
      %s27 = sadd.s32 1, %s18
      %s28 = scalar_select %p25, %s27, %s18
      %p29 = scmp.ge.s32.totalorder %s28, 2
      %s30 = scalar_select %p29, 0, %s28
      %s31 = ssub.s32 %s18, %s30
      %s32 = ssub.s32 %s19, %s26
      %s33 = sor.u32 %s31, %s32
      %p34 = scmp.eq.s32.totalorder %s33, 0
      %s36 = sadd.s32 %s35, 1
      %s37 = scalar_select %p34, %s35, %s36
      %p40 = pneg %p34
      %p41 = scmp.eq.s32.totalorder %s11, 1
      %p42 = por %p40, %p41
      %p43 = scmp.ne.s32.totalorder %s35, %s38
      %p44 = scmp.eq.s32.totalorder %s11, 0
      %p45 = por %p43, %p44
      %p46 = scmp.ne.s32.totalorder %s35, %s38
      %p47 = scmp.eq.s32.totalorder %s16, 1
      %p48 = por %p46, %p47
      %p49 = scmp.ne.s32.totalorder %s38, %s39
      %p50 = scmp.eq.s32.totalorder %s16, 0
      %p51 = por %p49, %p50
      %p52 = scmp.ne.s32.totalorder %s38, %s39
      %p53 = scmp.eq.s32.totalorder %s17, 1
      %p54 = por %p52, %p53
      %p56 = scmp.ne.s32.totalorder %s39, %s55
      %p57 = scmp.eq.s32.totalorder %s17, 0
      %p58 = por %p56, %p57
      %s60 = sadd.s32 %s59, 1
      %p63 = scmp.eq.s32.totalorder %s11, 1
      %p64 = scmp.ne.s32.totalorder %s59, %s61
      %p65 = scmp.eq.s32.totalorder %s11, 0
      %p66 = por %p64, %p65
      %p67 = scmp.ne.s32.totalorder %s59, %s61
      %p68 = scmp.eq.s32.totalorder %s16, 1
      %p69 = por %p67, %p68
      %p70 = scmp.ne.s32.totalorder %s61, %s62
      %p71 = scmp.eq.s32.totalorder %s16, 0
      %p72 = por %p70, %p71
      %p73 = scmp.ne.s32.totalorder %s61, %s62
      %p74 = scmp.eq.s32.totalorder %s17, 1
      %p75 = por %p73, %p74
      %p77 = scmp.ne.s32.totalorder %s62, %s76
      %p78 = scmp.eq.s32.totalorder %s17, 0
      %p79 = por %p77, %p78
      %s80 = ssub.s32 %s18, %s30
      %s81 = ssub.s32 %s19, %s26
      %s82 = sor.u32 %s80, %s81
      %p83 = scmp.eq.s32.totalorder %s82, 0
      %s85 = sadd.s32 %s84, 1
      %s86 = scalar_select %p83, %s84, %s85
      %p89 = pneg %p83
      %p90 = scmp.eq.s32.totalorder %s11, 1
      %p91 = por %p89, %p90
      %p92 = scmp.ne.s32.totalorder %s84, %s87
      %p93 = scmp.eq.s32.totalorder %s11, 0
      %p94 = por %p92, %p93
      %p95 = scmp.ne.s32.totalorder %s84, %s87
      %p96 = scmp.eq.s32.totalorder %s16, 1
      %p97 = por %p95, %p96
      %p98 = scmp.ne.s32.totalorder %s87, %s88
      %p99 = scmp.eq.s32.totalorder %s16, 0
      %p100 = por %p98, %p99
      %p101 = scmp.ne.s32.totalorder %s87, %s88
      %p102 = scmp.eq.s32.totalorder %s17, 1
      %p103 = por %p101, %p102
      %p105 = scmp.ne.s32.totalorder %s88, %s104
      %p106 = scmp.eq.s32.totalorder %s17, 0
      %p107 = por %p105, %p106
      %p108 = scmp.le.s32.totalorder 1, %s11
      %p109 = scmp.lt.s32.totalorder %s11, 3
      %p110 = pnand %p108, %p109
      %p111 = pneg %p110
      // Predicated region
      $region9: #{_lambda_.1} parent=5 // pred_check
        _
      $region10: #{_lambda_.1} parent=5 // pred_check_branch
        %113 = sbr.rel (%p110) target = $region12
      $region11: #{_lambda_.1} parent=5 // pred_region
        %s114 = ssub.s32 %s11, 1
        // Predicated region
        $region13: #{_lambda_.1} parent=11 // pred_check
          %p115 = pneg %p72
        $region14: #{_lambda_.1} parent=11 // pred_check_branch
          %117 = sbr.rel (%p115) target = $region16
        $region15: #{_lambda_.1} parent=11 // pred_region
          _
        $region16: #{_lambda_.1} parent=11 // pred_fallthru
          _
      $region12: #{_lambda_.1} parent=5 // pred_fallthru
        _
      %p118 = scmp.lt.s32.totalorder %s11, 2
      // Predicated region
      $region17: #{_lambda_.1} parent=5 // pred_check
        %p119 = pneg %p118
      $region18: #{_lambda_.1} parent=5 // pred_check_branch
        %121 = sbr.rel (%p119) target = $region20
      $region19: #{_lambda_.1} parent=5 // pred_region
        // Predicated region
        $region21: #{_lambda_.1} parent=19 // pred_check
          %p122 = pneg %p45
        $region22: #{_lambda_.1} parent=19 // pred_check_branch
          %124 = sbr.rel (%p122) target = $region24
        $region23: #{_lambda_.1} parent=19 // pred_region
          %s125 = sand.u32 %s35, 1
          %s126 = scalar_lea.sflag [#allocation4], %s125
          %s127 = sand.u32 %s35, 1
          %s128 = smul.addr %s127, 64
          %s129 = scalar_lea.vmem [#allocation3], %s128
          %s130 = smul.u32 8, %s19
          %s132 = ssub.s32 1024, 1024
          %133 = vsyncadd %s126, %s132
          %s134 = smul.addr %s18, 8
          %s135 = sadd.s32 %s130, %s134
          %s136 = smul.addr %s135, 128
          %s137 = scalar_lea.hbm %s0, %s136
          %s138 = sshll.u32 %s129, 4
          %s139 = int_to_ptr.vmem [resolvable:$true] %s138
          %144 = dma.hbm_to_vmem [thread:$0]  %s137, 1024, %s139, %s126, 128, 128, 8
        $region24: #{_lambda_.1} parent=19 // pred_fallthru
          _
      $region20: #{_lambda_.1} parent=5 // pred_fallthru
        _
      %p145 = scmp.le.s32.totalorder 1, %s11
      %p146 = scmp.lt.s32.totalorder %s11, 3
      %p147 = pnand %p145, %p146
      %p148 = pneg %p147
      // Predicated region
      $region25: #{_lambda_.1} parent=5 // pred_check
        _
      $region26: #{_lambda_.1} parent=5 // pred_check_branch
        %150 = sbr.rel (%p147) target = $region28
      $region27: #{_lambda_.1} parent=5 // pred_region
        %s151 = ssub.s32 %s11, 1
        %s152 = sand.u32 %s38, 1
        %s153 = scalar_lea.sflag [#allocation4], %s152
        %s154 = sand.u32 %s38, 1
        %s155 = smul.addr %s154, 64
        %s156 = scalar_lea.vmem [#allocation3], %s155
        // Predicated region
        $region29: #{_lambda_.1} parent=27 // pred_check
          %p157 = pneg %p51
        $region30: #{_lambda_.1} parent=27 // pred_check_branch
          %159 = sbr.rel (%p157) target = $region32
        $region31: #{_lambda_.1} parent=27 // pred_region
          %160 = dma.done %s153, 1024
        $region32: #{_lambda_.1} parent=27 // pred_fallthru
          _
        %s161 = sand.u32 %s38, 1
        %s162 = scalar_lea.sflag [#allocation4], %s161
        %s163 = sand.u32 %s38, 1
        %s164 = smul.addr %s163, 64
        %s165 = scalar_lea.vmem [#allocation3], %s164
        %p166 = pneg %p51
        %p167 = pneg %p48
        %p168 = pneg %p72
        %p169 = pneg %p69
        %p170 = pneg %p100
        %p171 = pneg %p97
        %s172 = smul.u32 4, %s21
        %p173 = scmp.lt.s32.totalorder %s20, 1
        %s174 = scalar_select %p173, %s20, 1
        %p175 = scmp.lt.s32.totalorder %s172, 3
        %s176 = scalar_select %p175, %s172, 3
        %s177 = smul.addr %s174, 16
        %s178 = sadd.s32 %s176, %s177
        %s179 = smul.addr %s178, 8
        %s180 = scalar_lea.vmem %s2, %s179
        %s181 = smul.u32 8, %s21
        %s182 = smul.u32 4, %s21
        %p183 = scmp.lt.s32.totalorder %s20, 1
        %s184 = scalar_select %p183, %s20, 1
        %p185 = scmp.lt.s32.totalorder %s182, 3
        %s186 = scalar_select %p185, %s182, 3
        %s187 = smul.addr %s184, 16
        %s188 = sadd.s32 %s186, %s187
        %s189 = smul.addr %s188, 8
        %s190 = scalar_lea.vmem %s2, %s189
        %s191 = smul.u32 4, %s21
        %v192 = vld [vmem:[%s156] sm:$0xff]
        %v193 = vld [vmem:[%s156 + $0x8] sm:$0xff]
        %v194 = vld [vmem:[%s156 + $0x10] sm:$0xff]
        %v195 = vld [vmem:[%s156 + $0x18] sm:$0xff]
        %v196 = vld [vmem:[%s156 + $0x20] sm:$0xff]
        %v197 = vld [vmem:[%s156 + $0x28] sm:$0xff]
        %v198 = vld [vmem:[%s156 + $0x30] sm:$0xff]
        %v199 = vld [vmem:[%s156 + $0x38] sm:$0xff]
        %v200 = vld [vmem:[%s1] sm:$0xff]
        %v201 = vld [vmem:[%s1 + $0x8] sm:$0xff]
        %vm202 = vcmask 130048
        %v204 = vsel %vm202, %v192, 0
        %v207 = vsel %vm202, %v193, 0
        %v210 = vsel %vm202, %v194, 0
        %v213 = vsel %vm202, %v195, 0
        %v216 = vsel %vm202, %v196, 0
        %v219 = vsel %vm202, %v197, 0
        %v222 = vsel %vm202, %v198, 0
        %v225 = vsel %vm202, %v199, 0
        %227 = vmatprep.subr.mxu0 0.0
        %v228 = vand.u32 %v200, 4294901760
        %229 = vmatpush1.msra.mxu0 %v228
        %230 = vmatprep.subr.mxu0 0.0
        %v231 = vand.u32 %v201, 4294901760
        %232 = vmatpush1.msra.mxu0 %v231
        %233 = vmatprep.subr.mxu0 0.0
        %234 = vmatpush1.msra.mxu0 0.0
        %235 = vmatprep.subr.mxu0 0.0
        %236 = vmatpush1.msra.mxu0 0.0
        %237 = vmatprep.subr.mxu0 0.0
        %238 = vmatpush1.msra.mxu0 0.0
        %239 = vmatprep.subr.mxu0 0.0
        %240 = vmatpush1.msra.mxu0 0.0
        %241 = vmatprep.subr.mxu0 0.0
        %242 = vmatpush1.msra.mxu0 0.0
        %243 = vmatprep.subr.mxu0 0.0
        %244 = vmatpush1.msra.mxu0 0.0
        %245 = vmatprep.subr.mxu0 0.0
        %246 = vmatpush1.msra.mxu0 0.0
        %247 = vmatprep.subr.mxu0 0.0
        %248 = vmatpush1.msra.mxu0 0.0
        %249 = vmatprep.subr.mxu0 0.0
        %250 = vmatpush1.msra.mxu0 0.0
        %251 = vmatprep.subr.mxu0 0.0
        %252 = vmatpush1.msra.mxu0 0.0
        %253 = vmatprep.subr.mxu0 0.0
        %254 = vmatpush1.msra.mxu0 0.0
        %255 = vmatprep.subr.mxu0 0.0
        %256 = vmatpush1.msra.mxu0 0.0
        %257 = vmatprep.subr.mxu0 0.0
        %258 = vmatpush1.msra.mxu0 0.0
        %259 = vmatprep.subr.mxu0 0.0
        %260 = vmatpush1.msra.mxu0 0.0
        %261 = vmatprep.subr.mxu0 0.0
        %262 = vmatpush1.msra.mxu0 0.0
        %263 = vmatprep.subr.mxu0 0.0
        %264 = vmatpush1.msra.mxu0 0.0
        %265 = vmatprep.subr.mxu0 0.0
        %266 = vmatpush1.msra.mxu0 0.0
        %267 = vmatprep.subr.mxu0 0.0
        %268 = vmatpush1.msra.mxu0 0.0
        %269 = vmatprep.subr.mxu0 0.0
        %270 = vmatpush1.msra.mxu0 0.0
        %271 = vmatprep.subr.mxu0 0.0
        %272 = vmatpush1.msra.mxu0 0.0
        %273 = vmatprep.subr.mxu0 0.0
        %274 = vmatpush1.msra.mxu0 0.0
        %275 = vmatprep.subr.mxu0 0.0
        %276 = vmatpush1.msra.mxu0 0.0
        %277 = vmatprep.subr.mxu0 0.0
        %278 = vmatpush1.msra.mxu0 0.0
        %279 = vmatprep.subr.mxu0 0.0
        %280 = vmatpush1.msra.mxu0 0.0
        %281 = vmatprep.subr.mxu0 0.0
        %282 = vmatpush1.msra.mxu0 0.0
        %283 = vmatprep.subr.mxu0 0.0
        %284 = vmatpush1.msra.mxu0 0.0
        %285 = vmatprep.subr.mxu0 0.0
        %286 = vmatpush1.msra.mxu0 0.0
        %287 = vmatprep.subr.mxu0 0.0
        %288 = vmatpush1.msra.mxu0 0.0
        %289 = vmatprep.subr.mxu0 0.0
        %290 = vmatpush1.msra.mxu0 0.0
        %291 = vmatprep.subr.mxu0 0.0
        %292 = vmatpush1.msra.mxu0 0.0
        %293 = vmatprep.mubr.f32.mxu0 0.0
        %v294 = vand.u32 %v204, 4294901760
        %v295 = vsub.f32 %v204, %v294
        %v296 = vand.u32 %v295, 4294901760
        %v297 = vsub.f32 %v295, %v296
        %v298 = vand.u32 %v297, 4294901760
        %299 = vmatmul.mubr.f32.gmra.mrb[0].mxu0 %v298
        %v300 = vpop.f32.mrb[0].mxu0
        %v301 = vadd.f32 0.0, %v300
        %v302 = vpop.f32.mrb[0].mxu0
        %303 = vmatprep.mubr.f32.mxu0 0.0
        %v304 = vand.u32 %v207, 4294901760
        %v305 = vsub.f32 %v207, %v304
        %v306 = vand.u32 %v305, 4294901760
        %v307 = vsub.f32 %v305, %v306
        %v308 = vand.u32 %v307, 4294901760
        %309 = vmatmul.mubr.f32.gmra.mrb[0].mxu0 %v308
        %v310 = vpop.f32.mrb[0].mxu0
        %v311 = vadd.f32 0.0, %v310
        %v312 = vpop.f32.mrb[0].mxu0
        %313 = vmatprep.mubr.f32.mxu0 0.0
        %v314 = vand.u32 %v210, 4294901760
        %v315 = vsub.f32 %v210, %v314
        %v316 = vand.u32 %v315, 4294901760
        %v317 = vsub.f32 %v315, %v316
        %v318 = vand.u32 %v317, 4294901760
        %319 = vmatmul.mubr.f32.gmra.mrb[0].mxu0 %v318
        %v320 = vpop.f32.mrb[0].mxu0
        %v321 = vadd.f32 0.0, %v320
        %v322 = vpop.f32.mrb[0].mxu0
        %323 = vmatprep.mubr.f32.mxu0 0.0
        %v324 = vand.u32 %v213, 4294901760
        %v325 = vsub.f32 %v213, %v324
        %v326 = vand.u32 %v325, 4294901760
        %v327 = vsub.f32 %v325, %v326
        %v328 = vand.u32 %v327, 4294901760
        %329 = vmatmul.mubr.f32.gmra.mrb[0].mxu0 %v328
        %v330 = vpop.f32.mrb[0].mxu0
        %v331 = vadd.f32 0.0, %v330
        %v332 = vpop.f32.mrb[0].mxu0
        %333 = vmatprep.mubr.f32.mxu0 0.0
        %v334 = vand.u32 %v216, 4294901760
        %v335 = vsub.f32 %v216, %v334
        %v336 = vand.u32 %v335, 4294901760
        %v337 = vsub.f32 %v335, %v336
        %v338 = vand.u32 %v337, 4294901760
        %339 = vmatmul.mubr.f32.gmra.mrb[0].mxu0 %v338
        %v340 = vpop.f32.mrb[0].mxu0
        %v341 = vadd.f32 0.0, %v340
        %v342 = vpop.f32.mrb[0].mxu0
        %343 = vmatprep.mubr.f32.mxu0 0.0
        %v344 = vand.u32 %v219, 4294901760
        %v345 = vsub.f32 %v219, %v344
        %v346 = vand.u32 %v345, 4294901760
        %v347 = vsub.f32 %v345, %v346
        %v348 = vand.u32 %v347, 4294901760
        %349 = vmatmul.mubr.f32.gmra.mrb[0].mxu0 %v348
        %v350 = vpop.f32.mrb[0].mxu0
        %v351 = vadd.f32 0.0, %v350
        %v352 = vpop.f32.mrb[0].mxu0
        %353 = vmatprep.mubr.f32.mxu0 0.0
        %v354 = vand.u32 %v222, 4294901760
        %v355 = vsub.f32 %v222, %v354
        %v356 = vand.u32 %v355, 4294901760
        %v357 = vsub.f32 %v355, %v356
        %v358 = vand.u32 %v357, 4294901760
        %359 = vmatmul.mubr.f32.gmra.mrb[0].mxu0 %v358
        %v360 = vpop.f32.mrb[0].mxu0
        %v361 = vadd.f32 0.0, %v360
        %v362 = vpop.f32.mrb[0].mxu0
        %363 = vmatprep.mubr.f32.mxu0 0.0
        %v364 = vand.u32 %v225, 4294901760
        %v365 = vsub.f32 %v225, %v364
        %v366 = vand.u32 %v365, 4294901760
        %v367 = vsub.f32 %v365, %v366
        %v368 = vand.u32 %v367, 4294901760
        %369 = vmatmul.mubr.f32.gmra.mrb[0].mxu0 %v368
        %v370 = vpop.f32.mrb[0].mxu0
        %v371 = vadd.f32 0.0, %v370
        %v372 = vpop.f32.mrb[0].mxu0
        %373 = vdwg.mxu0
        %374 = vmatprep.subr.mxu0 0.0
        %v375 = vand.u32 %v200, 4294901760
        %v376 = vsub.f32 %v200, %v375
        %v377 = vand.u32 %v376, 4294901760
        %v378 = vsub.f32 %v376, %v377
        %v379 = vand.u32 %v378, 4294901760
        %380 = vmatpush1.msra.mxu0 %v379
        %381 = vmatprep.subr.mxu0 0.0
        %v382 = vand.u32 %v201, 4294901760
        %v383 = vsub.f32 %v201, %v382
        %v384 = vand.u32 %v383, 4294901760
        %v385 = vsub.f32 %v383, %v384
        %v386 = vand.u32 %v385, 4294901760
        %387 = vmatpush1.msra.mxu0 %v386
        %388 = vmatprep.subr.mxu0 0.0
        %389 = vmatpush1.msra.mxu0 0.0
        %390 = vmatprep.subr.mxu0 0.0
        %391 = vmatpush1.msra.mxu0 0.0
        %392 = vmatprep.subr.mxu0 0.0
        %393 = vmatpush1.msra.mxu0 0.0
        %394 = vmatprep.subr.mxu0 0.0
        %395 = vmatpush1.msra.mxu0 0.0
        %396 = vmatprep.subr.mxu0 0.0
        %397 = vmatpush1.msra.mxu0 0.0
        %398 = vmatprep.subr.mxu0 0.0
        %399 = vmatpush1.msra.mxu0 0.0
        %400 = vmatprep.subr.mxu0 0.0
        %401 = vmatpush1.msra.mxu0 0.0
        %402 = vmatprep.subr.mxu0 0.0
        %403 = vmatpush1.msra.mxu0 0.0
        %404 = vmatprep.subr.mxu0 0.0
        %405 = vmatpush1.msra.mxu0 0.0
        %406 = vmatprep.subr.mxu0 0.0
        %407 = vmatpush1.msra.mxu0 0.0
        %408 = vmatprep.subr.mxu0 0.0
        %409 = vmatpush1.msra.mxu0 0.0
        %410 = vmatprep.subr.mxu0 0.0
        %411 = vmatpush1.msra.mxu0 0.0
        %412 = vmatprep.subr.mxu0 0.0
        %413 = vmatpush1.msra.mxu0 0.0
        %414 = vmatprep.subr.mxu0 0.0
        %415 = vmatpush1.msra.mxu0 0.0
        %416 = vmatprep.subr.mxu0 0.0
        %417 = vmatpush1.msra.mxu0 0.0
        %418 = vmatprep.subr.mxu0 0.0
        %419 = vmatpush1.msra.mxu0 0.0
        %420 = vmatprep.subr.mxu0 0.0
        %421 = vmatpush1.msra.mxu0 0.0
        %422 = vmatprep.subr.mxu0 0.0
        %423 = vmatpush1.msra.mxu0 0.0
        %424 = vmatprep.subr.mxu0 0.0
        %425 = vmatpush1.msra.mxu0 0.0
        %426 = vmatprep.subr.mxu0 0.0
        %427 = vmatpush1.msra.mxu0 0.0
        %428 = vmatprep.subr.mxu0 0.0
        %429 = vmatpush1.msra.mxu0 0.0
        %430 = vmatprep.subr.mxu0 0.0
        %431 = vmatpush1.msra.mxu0 0.0
        %432 = vmatprep.subr.mxu0 0.0
        %433 = vmatpush1.msra.mxu0 0.0
        %434 = vmatprep.subr.mxu0 0.0
        %435 = vmatpush1.msra.mxu0 0.0
        %436 = vmatprep.subr.mxu0 0.0
        %437 = vmatpush1.msra.mxu0 0.0
        %438 = vmatprep.subr.mxu0 0.0
        %439 = vmatpush1.msra.mxu0 0.0
        %440 = vmatprep.subr.mxu0 0.0
        %441 = vmatpush1.msra.mxu0 0.0
        %442 = vmatprep.subr.mxu0 0.0
        %443 = vmatpush1.msra.mxu0 0.0
        %444 = vmatprep.subr.mxu0 0.0
        %445 = vmatpush1.msra.mxu0 0.0
        %446 = vmatprep.subr.mxu0 0.0
        %447 = vmatpush1.msra.mxu0 0.0
        %448 = vmatprep.mubr.f32.mxu0 0.0
        %v449 = vand.u32 %v204, 4294901760
        %450 = vmatmul.mubr.f32.gmra.mrb[0].mxu0 %v449
        %v451 = vpop.f32.mrb[0].mxu0
        %v452 = vadd.f32 %v301, %v451
        %v453 = vpop.f32.mrb[0].mxu0
        %454 = vmatprep.mubr.f32.mxu0 0.0
        %v455 = vand.u32 %v207, 4294901760
        %456 = vmatmul.mubr.f32.gmra.mrb[0].mxu0 %v455
        %v457 = vpop.f32.mrb[0].mxu0
        %v458 = vadd.f32 %v311, %v457
        %v459 = vpop.f32.mrb[0].mxu0
        %460 = vmatprep.mubr.f32.mxu0 0.0
        %v461 = vand.u32 %v210, 4294901760
        %462 = vmatmul.mubr.f32.gmra.mrb[0].mxu0 %v461
        %v463 = vpop.f32.mrb[0].mxu0
        %v464 = vadd.f32 %v321, %v463
        %v465 = vpop.f32.mrb[0].mxu0
        %466 = vmatprep.mubr.f32.mxu0 0.0
        %v467 = vand.u32 %v213, 4294901760
        %468 = vmatmul.mubr.f32.gmra.mrb[0].mxu0 %v467
        %v469 = vpop.f32.mrb[0].mxu0
        %v470 = vadd.f32 %v331, %v469
        %v471 = vpop.f32.mrb[0].mxu0
        %472 = vmatprep.mubr.f32.mxu0 0.0
        %v473 = vand.u32 %v216, 4294901760
        %474 = vmatmul.mubr.f32.gmra.mrb[0].mxu0 %v473
        %v475 = vpop.f32.mrb[0].mxu0
        %v476 = vadd.f32 %v341, %v475
        %v477 = vpop.f32.mrb[0].mxu0
        %478 = vmatprep.mubr.f32.mxu0 0.0
        %v479 = vand.u32 %v219, 4294901760
        %480 = vmatmul.mubr.f32.gmra.mrb[0].mxu0 %v479
        %v481 = vpop.f32.mrb[0].mxu0
        %v482 = vadd.f32 %v351, %v481
        %v483 = vpop.f32.mrb[0].mxu0
        %484 = vmatprep.mubr.f32.mxu0 0.0
        %v485 = vand.u32 %v222, 4294901760
        %486 = vmatmul.mubr.f32.gmra.mrb[0].mxu0 %v485
        %v487 = vpop.f32.mrb[0].mxu0
        %v488 = vadd.f32 %v361, %v487
        %v489 = vpop.f32.mrb[0].mxu0
        %490 = vmatprep.mubr.f32.mxu0 0.0
        %v491 = vand.u32 %v225, 4294901760
        %492 = vmatmul.mubr.f32.gmra.mrb[0].mxu0 %v491
        %v493 = vpop.f32.mrb[0].mxu0
        %v494 = vadd.f32 %v371, %v493
        %v495 = vpop.f32.mrb[0].mxu0
        %496 = vdwg.mxu0
        %497 = vmatprep.subr.mxu0 0.0
        %v498 = vand.u32 %v200, 4294901760
        %v499 = vsub.f32 %v200, %v498
        %500 = vmatpush1.msra.mxu0 %v499
        %501 = vmatprep.subr.mxu0 0.0
        %v502 = vand.u32 %v201, 4294901760
        %v503 = vsub.f32 %v201, %v502
        %504 = vmatpush1.msra.mxu0 %v503
        %505 = vmatprep.subr.mxu0 0.0
        %506 = vmatpush1.msra.mxu0 0.0
        %507 = vmatprep.subr.mxu0 0.0
        %508 = vmatpush1.msra.mxu0 0.0
        %509 = vmatprep.subr.mxu0 0.0
        %510 = vmatpush1.msra.mxu0 0.0
        %511 = vmatprep.subr.mxu0 0.0
        %512 = vmatpush1.msra.mxu0 0.0
        %513 = vmatprep.subr.mxu0 0.0
        %514 = vmatpush1.msra.mxu0 0.0
        %515 = vmatprep.subr.mxu0 0.0
        %516 = vmatpush1.msra.mxu0 0.0
        %517 = vmatprep.subr.mxu0 0.0
        %518 = vmatpush1.msra.mxu0 0.0
        %519 = vmatprep.subr.mxu0 0.0
        %520 = vmatpush1.msra.mxu0 0.0
        %521 = vmatprep.subr.mxu0 0.0
        %522 = vmatpush1.msra.mxu0 0.0
        %523 = vmatprep.subr.mxu0 0.0
        %524 = vmatpush1.msra.mxu0 0.0
        %525 = vmatprep.subr.mxu0 0.0
        %526 = vmatpush1.msra.mxu0 0.0
        %527 = vmatprep.subr.mxu0 0.0
        %528 = vmatpush1.msra.mxu0 0.0
        %529 = vmatprep.subr.mxu0 0.0
        %530 = vmatpush1.msra.mxu0 0.0
        %531 = vmatprep.subr.mxu0 0.0
        %532 = vmatpush1.msra.mxu0 0.0
        %533 = vmatprep.subr.mxu0 0.0
        %534 = vmatpush1.msra.mxu0 0.0
        %535 = vmatprep.subr.mxu0 0.0
        %536 = vmatpush1.msra.mxu0 0.0
        %537 = vmatprep.subr.mxu0 0.0
        %538 = vmatpush1.msra.mxu0 0.0
        %539 = vmatprep.subr.mxu0 0.0
        %540 = vmatpush1.msra.mxu0 0.0
        %541 = vmatprep.subr.mxu0 0.0
        %542 = vmatpush1.msra.mxu0 0.0
        %543 = vmatprep.subr.mxu0 0.0
        %544 = vmatpush1.msra.mxu0 0.0
        %545 = vmatprep.subr.mxu0 0.0
        %546 = vmatpush1.msra.mxu0 0.0
        %547 = vmatprep.subr.mxu0 0.0
        %548 = vmatpush1.msra.mxu0 0.0
        %549 = vmatprep.subr.mxu0 0.0
        %550 = vmatpush1.msra.mxu0 0.0
        %551 = vmatprep.subr.mxu0 0.0
        %552 = vmatpush1.msra.mxu0 0.0
        %553 = vmatprep.subr.mxu0 0.0
        %554 = vmatpush1.msra.mxu0 0.0
        %555 = vmatprep.subr.mxu0 0.0
        %556 = vmatpush1.msra.mxu0 0.0
        %557 = vmatprep.subr.mxu0 0.0
        %558 = vmatpush1.msra.mxu0 0.0
        %559 = vmatprep.subr.mxu0 0.0
        %560 = vmatpush1.msra.mxu0 0.0
        %561 = vmatprep.subr.mxu0 0.0
        %562 = vmatpush1.msra.mxu0 0.0
        %563 = vmatprep.subr.mxu0 0.0
        %564 = vmatpush1.msra.mxu0 0.0
        %565 = vmatprep.mubr.f32.mxu0 0.0
        %v566 = vand.u32 %v204, 4294901760
        %v567 = vsub.f32 %v204, %v566
        %568 = vmatmul.mubr.f32.gmra.mrb[0].mxu0 %v567
        %v569 = vpop.f32.mrb[0].mxu0
        %v570 = vadd.f32 %v452, %v569
        %v571 = vpop.f32.mrb[0].mxu0
        %572 = vmatprep.mubr.f32.mxu0 0.0
        %v573 = vand.u32 %v207, 4294901760
        %v574 = vsub.f32 %v207, %v573
        %575 = vmatmul.mubr.f32.gmra.mrb[0].mxu0 %v574
        %v576 = vpop.f32.mrb[0].mxu0
        %v577 = vadd.f32 %v458, %v576
        %v578 = vpop.f32.mrb[0].mxu0
        %579 = vmatprep.mubr.f32.mxu0 0.0
        %v580 = vand.u32 %v210, 4294901760
        %v581 = vsub.f32 %v210, %v580
        %582 = vmatmul.mubr.f32.gmra.mrb[0].mxu0 %v581
        %v583 = vpop.f32.mrb[0].mxu0
        %v584 = vadd.f32 %v464, %v583
        %v585 = vpop.f32.mrb[0].mxu0
        %586 = vmatprep.mubr.f32.mxu0 0.0
        %v587 = vand.u32 %v213, 4294901760
        %v588 = vsub.f32 %v213, %v587
        %589 = vmatmul.mubr.f32.gmra.mrb[0].mxu0 %v588
        %v590 = vpop.f32.mrb[0].mxu0
        %v591 = vadd.f32 %v470, %v590
        %v592 = vpop.f32.mrb[0].mxu0
        %593 = vmatprep.mubr.f32.mxu0 0.0
        %v594 = vand.u32 %v216, 4294901760
        %v595 = vsub.f32 %v216, %v594
        %596 = vmatmul.mubr.f32.gmra.mrb[0].mxu0 %v595
        %v597 = vpop.f32.mrb[0].mxu0
        %v598 = vadd.f32 %v476, %v597
        %v599 = vpop.f32.mrb[0].mxu0
        %600 = vmatprep.mubr.f32.mxu0 0.0
        %v601 = vand.u32 %v219, 4294901760
        %v602 = vsub.f32 %v219, %v601
        %603 = vmatmul.mubr.f32.gmra.mrb[0].mxu0 %v602
        %v604 = vpop.f32.mrb[0].mxu0
        %v605 = vadd.f32 %v482, %v604
        %v606 = vpop.f32.mrb[0].mxu0
        %607 = vmatprep.mubr.f32.mxu0 0.0
        %v608 = vand.u32 %v222, 4294901760
        %v609 = vsub.f32 %v222, %v608
        %610 = vmatmul.mubr.f32.gmra.mrb[0].mxu0 %v609
        %v611 = vpop.f32.mrb[0].mxu0
        %v612 = vadd.f32 %v488, %v611
        %v613 = vpop.f32.mrb[0].mxu0
        %614 = vmatprep.mubr.f32.mxu0 0.0
        %v615 = vand.u32 %v225, 4294901760
        %v616 = vsub.f32 %v225, %v615
        %617 = vmatmul.mubr.f32.gmra.mrb[0].mxu0 %v616
        %v618 = vpop.f32.mrb[0].mxu0
        %v619 = vadd.f32 %v494, %v618
        %v620 = vpop.f32.mrb[0].mxu0
        %621 = vdwg.mxu0
        %622 = vmatprep.subr.mxu0 0.0
        %v623 = vand.u32 %v200, 4294901760
        %624 = vmatpush1.msra.mxu0 %v623
        %625 = vmatprep.subr.mxu0 0.0
        %v626 = vand.u32 %v201, 4294901760
        %627 = vmatpush1.msra.mxu0 %v626
        %628 = vmatprep.subr.mxu0 0.0
        %629 = vmatpush1.msra.mxu0 0.0
        %630 = vmatprep.subr.mxu0 0.0
        %631 = vmatpush1.msra.mxu0 0.0
        %632 = vmatprep.subr.mxu0 0.0
        %633 = vmatpush1.msra.mxu0 0.0
        %634 = vmatprep.subr.mxu0 0.0
        %635 = vmatpush1.msra.mxu0 0.0
        %636 = vmatprep.subr.mxu0 0.0
        %637 = vmatpush1.msra.mxu0 0.0
        %638 = vmatprep.subr.mxu0 0.0
        %639 = vmatpush1.msra.mxu0 0.0
        %640 = vmatprep.subr.mxu0 0.0
        %641 = vmatpush1.msra.mxu0 0.0
        %642 = vmatprep.subr.mxu0 0.0
        %643 = vmatpush1.msra.mxu0 0.0
        %644 = vmatprep.subr.mxu0 0.0
        %645 = vmatpush1.msra.mxu0 0.0
        %646 = vmatprep.subr.mxu0 0.0
        %647 = vmatpush1.msra.mxu0 0.0
        %648 = vmatprep.subr.mxu0 0.0
        %649 = vmatpush1.msra.mxu0 0.0
        %650 = vmatprep.subr.mxu0 0.0
        %651 = vmatpush1.msra.mxu0 0.0
        %652 = vmatprep.subr.mxu0 0.0
        %653 = vmatpush1.msra.mxu0 0.0
        %654 = vmatprep.subr.mxu0 0.0
        %655 = vmatpush1.msra.mxu0 0.0
        %656 = vmatprep.subr.mxu0 0.0
        %657 = vmatpush1.msra.mxu0 0.0
        %658 = vmatprep.subr.mxu0 0.0
        %659 = vmatpush1.msra.mxu0 0.0
        %660 = vmatprep.subr.mxu0 0.0
        %661 = vmatpush1.msra.mxu0 0.0
        %662 = vmatprep.subr.mxu0 0.0
        %663 = vmatpush1.msra.mxu0 0.0
        %664 = vmatprep.subr.mxu0 0.0
        %665 = vmatpush1.msra.mxu0 0.0
        %666 = vmatprep.subr.mxu0 0.0
        %667 = vmatpush1.msra.mxu0 0.0
        %668 = vmatprep.subr.mxu0 0.0
        %669 = vmatpush1.msra.mxu0 0.0
        %670 = vmatprep.subr.mxu0 0.0
        %671 = vmatpush1.msra.mxu0 0.0
        %672 = vmatprep.subr.mxu0 0.0
        %673 = vmatpush1.msra.mxu0 0.0
        %674 = vmatprep.subr.mxu0 0.0
        %675 = vmatpush1.msra.mxu0 0.0
        %676 = vmatprep.subr.mxu0 0.0
        %677 = vmatpush1.msra.mxu0 0.0
        %678 = vmatprep.subr.mxu0 0.0
        %679 = vmatpush1.msra.mxu0 0.0
        %680 = vmatprep.subr.mxu0 0.0
        %681 = vmatpush1.msra.mxu0 0.0
        %682 = vmatprep.subr.mxu0 0.0
        %683 = vmatpush1.msra.mxu0 0.0
        %684 = vmatprep.subr.mxu0 0.0
        %685 = vmatpush1.msra.mxu0 0.0
        %686 = vmatprep.subr.mxu0 0.0
        %687 = vmatpush1.msra.mxu0 0.0
        %688 = vmatprep.mubr.f32.mxu0 0.0
        %v689 = vand.u32 %v204, 4294901760
        %v690 = vsub.f32 %v204, %v689
        %v691 = vand.u32 %v690, 4294901760
        %692 = vmatmul.mubr.f32.gmra.mrb[0].mxu0 %v691
        %v693 = vpop.f32.mrb[0].mxu0
        %v694 = vadd.f32 %v570, %v693
        %v695 = vpop.f32.mrb[0].mxu0
        %696 = vmatprep.mubr.f32.mxu0 0.0
        %v697 = vand.u32 %v207, 4294901760
        %v698 = vsub.f32 %v207, %v697
        %v699 = vand.u32 %v698, 4294901760
        %700 = vmatmul.mubr.f32.gmra.mrb[0].mxu0 %v699
        %v701 = vpop.f32.mrb[0].mxu0
        %v702 = vadd.f32 %v577, %v701
        %v703 = vpop.f32.mrb[0].mxu0
        %704 = vmatprep.mubr.f32.mxu0 0.0
        %v705 = vand.u32 %v210, 4294901760
        %v706 = vsub.f32 %v210, %v705
        %v707 = vand.u32 %v706, 4294901760
        %708 = vmatmul.mubr.f32.gmra.mrb[0].mxu0 %v707
        %v709 = vpop.f32.mrb[0].mxu0
        %v710 = vadd.f32 %v584, %v709
        %v711 = vpop.f32.mrb[0].mxu0
        %712 = vmatprep.mubr.f32.mxu0 0.0
        %v713 = vand.u32 %v213, 4294901760
        %v714 = vsub.f32 %v213, %v713
        %v715 = vand.u32 %v714, 4294901760
        %716 = vmatmul.mubr.f32.gmra.mrb[0].mxu0 %v715
        %v717 = vpop.f32.mrb[0].mxu0
        %v718 = vadd.f32 %v591, %v717
        %v719 = vpop.f32.mrb[0].mxu0
        %720 = vmatprep.mubr.f32.mxu0 0.0
        %v721 = vand.u32 %v216, 4294901760
        %v722 = vsub.f32 %v216, %v721
        %v723 = vand.u32 %v722, 4294901760
        %724 = vmatmul.mubr.f32.gmra.mrb[0].mxu0 %v723
        %v725 = vpop.f32.mrb[0].mxu0
        %v726 = vadd.f32 %v598, %v725
        %v727 = vpop.f32.mrb[0].mxu0
        %728 = vmatprep.mubr.f32.mxu0 0.0
        %v729 = vand.u32 %v219, 4294901760
        %v730 = vsub.f32 %v219, %v729
        %v731 = vand.u32 %v730, 4294901760
        %732 = vmatmul.mubr.f32.gmra.mrb[0].mxu0 %v731
        %v733 = vpop.f32.mrb[0].mxu0
        %v734 = vadd.f32 %v605, %v733
        %v735 = vpop.f32.mrb[0].mxu0
        %736 = vmatprep.mubr.f32.mxu0 0.0
        %v737 = vand.u32 %v222, 4294901760
        %v738 = vsub.f32 %v222, %v737
        %v739 = vand.u32 %v738, 4294901760
        %740 = vmatmul.mubr.f32.gmra.mrb[0].mxu0 %v739
        %v741 = vpop.f32.mrb[0].mxu0
        %v742 = vadd.f32 %v612, %v741
        %v743 = vpop.f32.mrb[0].mxu0
        %744 = vmatprep.mubr.f32.mxu0 0.0
        %v745 = vand.u32 %v225, 4294901760
        %v746 = vsub.f32 %v225, %v745
        %v747 = vand.u32 %v746, 4294901760
        %748 = vmatmul.mubr.f32.gmra.mrb[0].mxu0 %v747
        %v749 = vpop.f32.mrb[0].mxu0
        %v750 = vadd.f32 %v619, %v749
        %v751 = vpop.f32.mrb[0].mxu0
        %752 = vdwg.mxu0
        %753 = vmatprep.subr.mxu0 0.0
        %v754 = vand.u32 %v200, 4294901760
        %v755 = vsub.f32 %v200, %v754
        %v756 = vand.u32 %v755, 4294901760
        %757 = vmatpush1.msra.mxu0 %v756
        %758 = vmatprep.subr.mxu0 0.0
        %v759 = vand.u32 %v201, 4294901760
        %v760 = vsub.f32 %v201, %v759
        %v761 = vand.u32 %v760, 4294901760
        %762 = vmatpush1.msra.mxu0 %v761
        %763 = vmatprep.subr.mxu0 0.0
        %764 = vmatpush1.msra.mxu0 0.0
        %765 = vmatprep.subr.mxu0 0.0
        %766 = vmatpush1.msra.mxu0 0.0
        %767 = vmatprep.subr.mxu0 0.0
        %768 = vmatpush1.msra.mxu0 0.0
        %769 = vmatprep.subr.mxu0 0.0
        %770 = vmatpush1.msra.mxu0 0.0
        %771 = vmatprep.subr.mxu0 0.0
        %772 = vmatpush1.msra.mxu0 0.0
        %773 = vmatprep.subr.mxu0 0.0
        %774 = vmatpush1.msra.mxu0 0.0
        %775 = vmatprep.subr.mxu0 0.0
        %776 = vmatpush1.msra.mxu0 0.0
        %777 = vmatprep.subr.mxu0 0.0
        %778 = vmatpush1.msra.mxu0 0.0
        %779 = vmatprep.subr.mxu0 0.0
        %780 = vmatpush1.msra.mxu0 0.0
        %781 = vmatprep.subr.mxu0 0.0
        %782 = vmatpush1.msra.mxu0 0.0
        %783 = vmatprep.subr.mxu0 0.0
        %784 = vmatpush1.msra.mxu0 0.0
        %785 = vmatprep.subr.mxu0 0.0
        %786 = vmatpush1.msra.mxu0 0.0
        %787 = vmatprep.subr.mxu0 0.0
        %788 = vmatpush1.msra.mxu0 0.0
        %789 = vmatprep.subr.mxu0 0.0
        %790 = vmatpush1.msra.mxu0 0.0
        %791 = vmatprep.subr.mxu0 0.0
        %792 = vmatpush1.msra.mxu0 0.0
        %793 = vmatprep.subr.mxu0 0.0
        %794 = vmatpush1.msra.mxu0 0.0
        %795 = vmatprep.subr.mxu0 0.0
        %796 = vmatpush1.msra.mxu0 0.0
        %797 = vmatprep.subr.mxu0 0.0
        %798 = vmatpush1.msra.mxu0 0.0
        %799 = vmatprep.subr.mxu0 0.0
        %800 = vmatpush1.msra.mxu0 0.0
        %801 = vmatprep.subr.mxu0 0.0
        %802 = vmatpush1.msra.mxu0 0.0
        %803 = vmatprep.subr.mxu0 0.0
        %804 = vmatpush1.msra.mxu0 0.0
        %805 = vmatprep.subr.mxu0 0.0
        %806 = vmatpush1.msra.mxu0 0.0
        %807 = vmatprep.subr.mxu0 0.0
        %808 = vmatpush1.msra.mxu0 0.0
        %809 = vmatprep.subr.mxu0 0.0
        %810 = vmatpush1.msra.mxu0 0.0
        %811 = vmatprep.subr.mxu0 0.0
        %812 = vmatpush1.msra.mxu0 0.0
        %813 = vmatprep.subr.mxu0 0.0
        %814 = vmatpush1.msra.mxu0 0.0
        %815 = vmatprep.subr.mxu0 0.0
        %816 = vmatpush1.msra.mxu0 0.0
        %817 = vmatprep.subr.mxu0 0.0
        %818 = vmatpush1.msra.mxu0 0.0
        %819 = vmatprep.subr.mxu0 0.0
        %820 = vmatpush1.msra.mxu0 0.0
        %821 = vmatprep.subr.mxu0 0.0
        %822 = vmatpush1.msra.mxu0 0.0
        %823 = vmatprep.mubr.f32.mxu0 0.0
        %v824 = vand.u32 %v204, 4294901760
        %825 = vmatmul.mubr.f32.gmra.mrb[0].mxu0 %v824
        %v826 = vpop.f32.mrb[0].mxu0
        %v827 = vadd.f32 %v694, %v826
        %v828 = vpop.f32.mrb[0].mxu0
        %829 = vmatprep.mubr.f32.mxu0 0.0
        %v830 = vand.u32 %v207, 4294901760
        %831 = vmatmul.mubr.f32.gmra.mrb[0].mxu0 %v830
        %v832 = vpop.f32.mrb[0].mxu0
        %v833 = vadd.f32 %v702, %v832
        %v834 = vpop.f32.mrb[0].mxu0
        %835 = vmatprep.mubr.f32.mxu0 0.0
        %v836 = vand.u32 %v210, 4294901760
        %837 = vmatmul.mubr.f32.gmra.mrb[0].mxu0 %v836
        %v838 = vpop.f32.mrb[0].mxu0
        %v839 = vadd.f32 %v710, %v838
        %v840 = vpop.f32.mrb[0].mxu0
        %841 = vmatprep.mubr.f32.mxu0 0.0
        %v842 = vand.u32 %v213, 4294901760
        %843 = vmatmul.mubr.f32.gmra.mrb[0].mxu0 %v842
        %v844 = vpop.f32.mrb[0].mxu0
        %v845 = vadd.f32 %v718, %v844
        %v846 = vpop.f32.mrb[0].mxu0
        %847 = vmatprep.mubr.f32.mxu0 0.0
        %v848 = vand.u32 %v216, 4294901760
        %849 = vmatmul.mubr.f32.gmra.mrb[0].mxu0 %v848
        %v850 = vpop.f32.mrb[0].mxu0
        %v851 = vadd.f32 %v726, %v850
        %v852 = vpop.f32.mrb[0].mxu0
        %853 = vmatprep.mubr.f32.mxu0 0.0
        %v854 = vand.u32 %v219, 4294901760
        %855 = vmatmul.mubr.f32.gmra.mrb[0].mxu0 %v854
        %v856 = vpop.f32.mrb[0].mxu0
        %v857 = vadd.f32 %v734, %v856
        %v858 = vpop.f32.mrb[0].mxu0
        %859 = vmatprep.mubr.f32.mxu0 0.0
        %v860 = vand.u32 %v222, 4294901760
        %861 = vmatmul.mubr.f32.gmra.mrb[0].mxu0 %v860
        %v862 = vpop.f32.mrb[0].mxu0
        %v863 = vadd.f32 %v742, %v862
        %v864 = vpop.f32.mrb[0].mxu0
        %865 = vmatprep.mubr.f32.mxu0 0.0
        %v866 = vand.u32 %v225, 4294901760
        %867 = vmatmul.mubr.f32.gmra.mrb[0].mxu0 %v866
        %v868 = vpop.f32.mrb[0].mxu0
        %v869 = vadd.f32 %v750, %v868
        %v870 = vpop.f32.mrb[0].mxu0
        %871 = vdwg.mxu0
        %872 = vmatprep.subr.mxu0 0.0
        %v873 = vand.u32 %v200, 4294901760
        %874 = vmatpush1.msra.mxu0 %v873
        %875 = vmatprep.subr.mxu0 0.0
        %v876 = vand.u32 %v201, 4294901760
        %877 = vmatpush1.msra.mxu0 %v876
        %878 = vmatprep.subr.mxu0 0.0
        %879 = vmatpush1.msra.mxu0 0.0
        %880 = vmatprep.subr.mxu0 0.0
        %881 = vmatpush1.msra.mxu0 0.0
        %882 = vmatprep.subr.mxu0 0.0
        %883 = vmatpush1.msra.mxu0 0.0
        %884 = vmatprep.subr.mxu0 0.0
        %885 = vmatpush1.msra.mxu0 0.0
        %886 = vmatprep.subr.mxu0 0.0
        %887 = vmatpush1.msra.mxu0 0.0
        %888 = vmatprep.subr.mxu0 0.0
        %889 = vmatpush1.msra.mxu0 0.0
        %890 = vmatprep.subr.mxu0 0.0
        %891 = vmatpush1.msra.mxu0 0.0
        %892 = vmatprep.subr.mxu0 0.0
        %893 = vmatpush1.msra.mxu0 0.0
        %894 = vmatprep.subr.mxu0 0.0
        %895 = vmatpush1.msra.mxu0 0.0
        %896 = vmatprep.subr.mxu0 0.0
        %897 = vmatpush1.msra.mxu0 0.0
        %898 = vmatprep.subr.mxu0 0.0
        %899 = vmatpush1.msra.mxu0 0.0
        %900 = vmatprep.subr.mxu0 0.0
        %901 = vmatpush1.msra.mxu0 0.0
        %902 = vmatprep.subr.mxu0 0.0
        %903 = vmatpush1.msra.mxu0 0.0
        %904 = vmatprep.subr.mxu0 0.0
        %905 = vmatpush1.msra.mxu0 0.0
        %906 = vmatprep.subr.mxu0 0.0
        %907 = vmatpush1.msra.mxu0 0.0
        %908 = vmatprep.subr.mxu0 0.0
        %909 = vmatpush1.msra.mxu0 0.0
        %910 = vmatprep.subr.mxu0 0.0
        %911 = vmatpush1.msra.mxu0 0.0
        %912 = vmatprep.subr.mxu0 0.0
        %913 = vmatpush1.msra.mxu0 0.0
        %914 = vmatprep.subr.mxu0 0.0
        %915 = vmatpush1.msra.mxu0 0.0
        %916 = vmatprep.subr.mxu0 0.0
        %917 = vmatpush1.msra.mxu0 0.0
        %918 = vmatprep.subr.mxu0 0.0
        %919 = vmatpush1.msra.mxu0 0.0
        %920 = vmatprep.subr.mxu0 0.0
        %921 = vmatpush1.msra.mxu0 0.0
        %922 = vmatprep.subr.mxu0 0.0
        %923 = vmatpush1.msra.mxu0 0.0
        %924 = vmatprep.subr.mxu0 0.0
        %925 = vmatpush1.msra.mxu0 0.0
        %926 = vmatprep.subr.mxu0 0.0
        %927 = vmatpush1.msra.mxu0 0.0
        %928 = vmatprep.subr.mxu0 0.0
        %929 = vmatpush1.msra.mxu0 0.0
        %930 = vmatprep.subr.mxu0 0.0
        %931 = vmatpush1.msra.mxu0 0.0
        %932 = vmatprep.subr.mxu0 0.0
        %933 = vmatpush1.msra.mxu0 0.0
        %934 = vmatprep.subr.mxu0 0.0
        %935 = vmatpush1.msra.mxu0 0.0
        %936 = vmatprep.subr.mxu0 0.0
        %937 = vmatpush1.msra.mxu0 0.0
        %938 = vmatprep.mubr.f32.mxu0 0.0
        %v939 = vand.u32 %v204, 4294901760
        %940 = vmatmul.mubr.f32.gmra.mrb[0].mxu0 %v939
        %v941 = vpop.f32.mrb[0].mxu0
        %v942 = vadd.f32 %v827, %v941
        %v943 = vpop.f32.mrb[0].mxu0
        %944 = vmatprep.mubr.f32.mxu0 0.0
        %v945 = vand.u32 %v207, 4294901760
        %946 = vmatmul.mubr.f32.gmra.mrb[0].mxu0 %v945
        %v947 = vpop.f32.mrb[0].mxu0
        %v948 = vadd.f32 %v833, %v947
        %v949 = vpop.f32.mrb[0].mxu0
        %950 = vmatprep.mubr.f32.mxu0 0.0
        %v951 = vand.u32 %v210, 4294901760
        %952 = vmatmul.mubr.f32.gmra.mrb[0].mxu0 %v951
        %v953 = vpop.f32.mrb[0].mxu0
        %v954 = vadd.f32 %v839, %v953
        %v955 = vpop.f32.mrb[0].mxu0
        %956 = vmatprep.mubr.f32.mxu0 0.0
        %v957 = vand.u32 %v213, 4294901760
        %958 = vmatmul.mubr.f32.gmra.mrb[0].mxu0 %v957
        %v959 = vpop.f32.mrb[0].mxu0
        %v960 = vadd.f32 %v845, %v959
        %v961 = vpop.f32.mrb[0].mxu0
        %962 = vmatprep.mubr.f32.mxu0 0.0
        %v963 = vand.u32 %v216, 4294901760
        %964 = vmatmul.mubr.f32.gmra.mrb[0].mxu0 %v963
        %v965 = vpop.f32.mrb[0].mxu0
        %v966 = vadd.f32 %v851, %v965
        %v967 = vpop.f32.mrb[0].mxu0
        %968 = vmatprep.mubr.f32.mxu0 0.0
        %v969 = vand.u32 %v219, 4294901760
        %970 = vmatmul.mubr.f32.gmra.mrb[0].mxu0 %v969
        %v971 = vpop.f32.mrb[0].mxu0
        %v972 = vadd.f32 %v857, %v971
        %v973 = vpop.f32.mrb[0].mxu0
        %974 = vmatprep.mubr.f32.mxu0 0.0
        %v975 = vand.u32 %v222, 4294901760
        %976 = vmatmul.mubr.f32.gmra.mrb[0].mxu0 %v975
        %v977 = vpop.f32.mrb[0].mxu0
        %v978 = vadd.f32 %v863, %v977
        %v979 = vpop.f32.mrb[0].mxu0
        %980 = vmatprep.mubr.f32.mxu0 0.0
        %v981 = vand.u32 %v225, 4294901760
        %982 = vmatmul.mubr.f32.gmra.mrb[0].mxu0 %v981
        %v983 = vpop.f32.mrb[0].mxu0
        %v984 = vadd.f32 %v869, %v983
        %v985 = vpop.f32.mrb[0].mxu0
        %986 = vdwg.mxu0
        %987 = vst.msk [vmem:[#allocation2] sm:$0xff] %vm202, %v942
        %988 = vst.msk [vmem:[#allocation2 + $0x8] sm:$0xff] %vm202, %v948
        %989 = vst.msk [vmem:[#allocation2 + $0x10] sm:$0xff] %vm202, %v954
        %990 = vst.msk [vmem:[#allocation2 + $0x18] sm:$0xff] %vm202, %v960
        %991 = vst.msk [vmem:[#allocation2 + $0x20] sm:$0xff] %vm202, %v966
        %992 = vst.msk [vmem:[#allocation2 + $0x28] sm:$0xff] %vm202, %v972
        %993 = vst.msk [vmem:[#allocation2 + $0x30] sm:$0xff] %vm202, %v978
        %994 = vst.msk [vmem:[#allocation2 + $0x38] sm:$0xff] %vm202, %v984
        %v995 = vld [vmem:[#allocation2] ss:$2 sm:$0xff]
        %vm996 = vcmask 64512
        %997 = vst.msk [vmem:[%s190] sm:$0xff] %vm996, %v995
        %999 = vrot.lane.b32.xlu0 %v995, 120
        %v1000 = vpop.permute.xlu0 %999
        %s1002 = scalar_lea.vmem %s190, 32
        %1003 = vst.msk [vmem:[%s1002] sm:$0xff] %vm996, %v1000
        %s1004 = scalar_lea.vmem [#allocation2], 1
        %v1005 = vld [vmem:[%s1004] ss:$2 sm:$0xff]
        %s1006 = scalar_lea.vmem %s190, 64
        %1007 = vst.msk [vmem:[%s1006] sm:$0xff] %vm996, %v1005
        %1009 = vrot.lane.b32.xlu0 %v1005, 120
        %v1010 = vpop.permute.xlu0 %1009
        %s1012 = scalar_lea.vmem %s190, 96
        %1013 = vst.msk [vmem:[%s1012] sm:$0xff] %vm996, %v1010
        %s1014 = scalar_lea.vmem [#allocation2], 16
        %v1015 = vld [vmem:[%s1014] ss:$2 sm:$0xff]
        %s1016 = scalar_lea.vmem %s190, 8
        %1017 = vst.msk [vmem:[%s1016] sm:$0xff] %vm996, %v1015
        %1019 = vrot.lane.b32.xlu0 %v1015, 120
        %v1020 = vpop.permute.xlu0 %1019
        %s1022 = scalar_lea.vmem %s190, 40
        %1023 = vst.msk [vmem:[%s1022] sm:$0xff] %vm996, %v1020
        %s1024 = scalar_lea.vmem [#allocation2], 17
        %v1025 = vld [vmem:[%s1024] ss:$2 sm:$0xff]
        %s1026 = scalar_lea.vmem %s190, 72
        %1027 = vst.msk [vmem:[%s1026] sm:$0xff] %vm996, %v1025
        %1029 = vrot.lane.b32.xlu0 %v1025, 120
        %v1030 = vpop.permute.xlu0 %1029
        %s1032 = scalar_lea.vmem %s190, 104
        %1033 = vst.msk [vmem:[%s1032] sm:$0xff] %vm996, %v1030
        %s1034 = scalar_lea.vmem [#allocation2], 32
        %v1035 = vld [vmem:[%s1034] ss:$2 sm:$0xff]
        %s1036 = scalar_lea.vmem %s190, 16
        %1037 = vst.msk [vmem:[%s1036] sm:$0xff] %vm996, %v1035
        %1039 = vrot.lane.b32.xlu0 %v1035, 120
        %v1040 = vpop.permute.xlu0 %1039
        %s1042 = scalar_lea.vmem %s190, 48
        %1043 = vst.msk [vmem:[%s1042] sm:$0xff] %vm996, %v1040
        %s1044 = scalar_lea.vmem [#allocation2], 33
        %v1045 = vld [vmem:[%s1044] ss:$2 sm:$0xff]
        %s1046 = scalar_lea.vmem %s190, 80
        %1047 = vst.msk [vmem:[%s1046] sm:$0xff] %vm996, %v1045
        %1049 = vrot.lane.b32.xlu0 %v1045, 120
        %v1050 = vpop.permute.xlu0 %1049
        %s1052 = scalar_lea.vmem %s190, 112
        %1053 = vst.msk [vmem:[%s1052] sm:$0xff] %vm996, %v1050
        %s1054 = scalar_lea.vmem [#allocation2], 48
        %v1055 = vld [vmem:[%s1054] ss:$2 sm:$0xff]
        %s1056 = scalar_lea.vmem %s190, 24
        %1057 = vst.msk [vmem:[%s1056] sm:$0xff] %vm996, %v1055
        %1059 = vrot.lane.b32.xlu0 %v1055, 120
        %v1060 = vpop.permute.xlu0 %1059
        %s1062 = scalar_lea.vmem %s190, 56
        %1063 = vst.msk [vmem:[%s1062] sm:$0xff] %vm996, %v1060
        %s1064 = scalar_lea.vmem [#allocation2], 49
        %v1065 = vld [vmem:[%s1064] ss:$2 sm:$0xff]
        %s1066 = scalar_lea.vmem %s190, 88
        %1067 = vst.msk [vmem:[%s1066] sm:$0xff] %vm996, %v1065
        %1069 = vrot.lane.b32.xlu0 %v1065, 120
        %v1070 = vpop.permute.xlu0 %1069
        %s1072 = scalar_lea.vmem %s190, 120
        %1073 = vst.msk [vmem:[%s1072] sm:$0xff] %vm996, %v1070
        %s1074 = smul.u32 4, %s21
        %p1075 = scmp.lt.s32.totalorder %s20, 1
        %s1076 = scalar_select %p1075, %s20, 1
        %p1077 = scmp.lt.s32.totalorder %s1074, 3
        %s1078 = scalar_select %p1077, %s1074, 3
        %s1079 = smul.addr %s1076, 16
        %s1080 = sadd.s32 %s1078, %s1079
        %s1081 = smul.addr %s1080, 8
        %s1082 = scalar_lea.vmem %s2, %s1081
        // Predicated region
        $region33: #{_lambda_.1} parent=27 // pred_check
          %p1083 = pneg %p97
        $region34: #{_lambda_.1} parent=27 // pred_check_branch
          %1085 = sbr.rel (%p1083) target = $region36
        $region35: #{_lambda_.1} parent=27 // pred_region
          %s1086 = smul.u32 4, %s21
        $region36: #{_lambda_.1} parent=27 // pred_fallthru
          _
      $region28: #{_lambda_.1} parent=5 // pred_fallthru
        _
      %p1087 = scmp.le.s32.totalorder 2, %s11
      // Predicated region
      $region37: #{_lambda_.1} parent=5 // pred_check
        %p1088 = pneg %p1087
      $region38: #{_lambda_.1} parent=5 // pred_check_branch
        %1090 = sbr.rel (%p1088) target = $region40
      $region39: #{_lambda_.1} parent=5 // pred_region
        %s1091 = ssub.s32 %s11, 2
        // Predicated region
        $region41: #{_lambda_.1} parent=39 // pred_check
          %p1092 = pneg %p103
        $region42: #{_lambda_.1} parent=39 // pred_check_branch
          %1094 = sbr.rel (%p1092) target = $region44
        $region43: #{_lambda_.1} parent=39 // pred_region
          %s1095 = smul.u32 4, %s23
          %p1096 = scmp.lt.s32.totalorder %s22, 1
          %s1097 = scalar_select %p1096, %s22, 1
          %p1098 = scmp.lt.s32.totalorder %s1095, 3
          %s1099 = scalar_select %p1098, %s1095, 3
          %s1100 = smul.addr %s1097, 16
          %s1101 = sadd.s32 %s1099, %s1100
          %s1102 = smul.addr %s1101, 8
          %s1103 = scalar_lea.vmem %s2, %s1102
        $region44: #{_lambda_.1} parent=39 // pred_fallthru
          _
      $region40: #{_lambda_.1} parent=5 // pred_fallthru
        _
    $region6: #{_lambda_.1} parent=1 // loop_footer
      %s15 = sadd.s32 1, %s11
    $region7: #{_lambda_.1} parent=1 // loop_footer_branch
      %10 = sbr.rel target = $region3
    $region8: #{_lambda_.1} parent=1 // loop_exit
      _
    %1104 = vsyncpa [#allocation4], 1
    %s1105 = scalar_lea.sflag [#allocation4], 1
    %1106 = vsyncpa %s1105, 1

</llo_original>
